<compile_context>
chip_gen: v7x
topology: tpu7x:2x2x1
jax: 0.10.0
libtpu: 0.0.40
codegen_flags: <defaults>
</compile_context>

<pallas_src>
import collections

import jax
import jax.numpy as jnp
from jax.experimental import pallas as pl
from jax.experimental.pallas import tpu as pltpu


# ---------------------------------------------------------------------------
# Pallas kernel body: identity on a lane-dense (block_rows, lanes) tile.
# Derived layers would replace this body with real compute on the same tiling.
# ---------------------------------------------------------------------------
def _copy_kernel(x_ref, o_ref):
    o_ref[...] = x_ref[...]


# Tile sizing (f32):
#   - 512 lanes (multiple of 128) -> full unmasked vector stores.
#   - 2048 rows x 512 lanes x 4 B = 4 MiB per tile; double-buffered in + out
#     = 16 MiB VMEM, covered by the explicit 32 MiB scoped-VMEM limit below.
_TILE_ROWS = 2048
_LANES = 512
_VMEM_LIMIT_BYTES = 32 * 1024 * 1024


def _pallas_copy_slab(slab: jax.Array, *, tile_rows: int) -> jax.Array:
    """Tiled, double-buffered Pallas copy of a 2D (rows, lanes) slab."""
    rows, lanes = slab.shape

    # Block-row selection:
    #   rows <= 8       -> single full-array block (the "block == full dims"
    #                      exception satisfies the (8, 128) rule).
    #   8 < rows < 16   -> 8-row blocks (grid of 2) so both v7x TCs get work.
    #   rows >= 16      -> split into >= 2 blocks of at most `tile_rows` rows,
    #                      rounded up to a multiple of 8 (f32 sublane tiling).
    if rows <= 8:
        block_rows = rows
    elif rows < 16:
        block_rows = 8
    else:
        half = pl.cdiv(rows, 2)
        half = pl.cdiv(half, 8) * 8
        block_rows = min(tile_rows, half)

    grid = (pl.cdiv(rows, block_rows),)  # tail block (if any) is masked by Pallas

    itemsize = jnp.dtype(slab.dtype).itemsize
    bytes_accessed = 2 * rows * lanes * itemsize  # one read + one write pass

    return pl.pallas_call(
        _copy_kernel,
        out_shape=jax.ShapeDtypeStruct((rows, lanes), slab.dtype),
        grid=grid,
        in_specs=[pl.BlockSpec((block_rows, lanes), lambda i: (i, 0))],
        out_specs=pl.BlockSpec((block_rows, lanes), lambda i: (i, 0)),
        compiler_params=pltpu.CompilerParams(
            dimension_semantics=("parallel",),
            vmem_limit_bytes=_VMEM_LIMIT_BYTES,
        ),
        cost_estimate=pl.CostEstimate(
            flops=0, transcendentals=0, bytes_accessed=bytes_accessed
        ),
    )(slab)


def pallas_identity_copy(x: jax.Array, *, tile_rows: int = _TILE_ROWS,
                         lanes: int = _LANES) -> jax.Array:
    """Identity pass-through via a tiled, lane-dense Pallas copy kernel.

    Template for derived layers: the input is viewed as a (rows, lanes) slab
    (pad-free whenever x.size is a multiple of 128) and streamed tile-by-tile
    through VMEM with BlockSpec double-buffering.
    """
    if lanes < 128 or lanes % 128 != 0:
        raise ValueError("lanes must be a multiple of 128 (got %d); sub-128 "
                         "lane widths force masked stores." % lanes)
    if tile_rows < 8 or tile_rows % 8 != 0:
        raise ValueError("tile_rows must be a positive multiple of 8")

    orig_shape = x.shape
    n = int(x.size)
    if n == 0:
        return x

    flat = x.reshape(-1)

    # Pick the widest lane count (multiple of 128, <= preference order) that
    # divides n exactly -> no host-side pad/slice, no extra HBM passes.
    lanes_eff = None
    for cand in (lanes, 512, 256, 128):
        if cand >= 128 and cand % 128 == 0 and n % cand == 0:
            lanes_eff = cand
            break

    if lanes_eff is not None:
        slab = flat.reshape(n // lanes_eff, lanes_eff)
        out = _pallas_copy_slab(slab, tile_rows=tile_rows)
        return out.reshape(orig_shape)

    # Ragged fallback: n is not a multiple of 128, so a lane-dense 2D view
    # requires padding the tail (<= lanes-1 elements).  The pad and final
    # slice are extra HBM passes.
    # TODO(synk): derived layers should size tensors to multiples of 128 (or
    # copy the tiny tail via a separate SMEM/1-row path) to stay pad-free.
    padded = pl.cdiv(n, lanes) * lanes
    flat = jnp.pad(flat, (0, padded - n))
    slab = flat.reshape(padded // lanes, lanes)
    out = _pallas_copy_slab(slab, tile_rows=tile_rows)
    return out.reshape(-1)[:n].reshape(orig_shape)


def identity_forward(x: jax.Array, *, use_pallas: bool = False,
                     tile_rows: int = _TILE_ROWS,
                     lanes: int = _LANES) -> jax.Array:
    """Identity forward.

    By default returns `x` unchanged (zero HBM traffic -- the fastest correct
    implementation of a pure identity).  Set use_pallas=True to route through
    the tiled Pallas copy kernel (the template for derived layers).
    """
    if not use_pallas:
        return x
    return pallas_identity_copy(x, tile_rows=tile_rows, lanes=lanes)


# ---------------------------------------------------------------------------
# JAX re-implementation of the Layer base class bookkeeping
# ---------------------------------------------------------------------------
class Layer:
    def __init__(self, incoming, **kwargs):
        if isinstance(incoming, tuple):
            self.input_shape = incoming
            self.input_layer = None
        else:
            self.input_shape = incoming.output_shape
            self.input_layer = incoming
        self.kwargs = kwargs
        self.params = collections.OrderedDict()

    def add_param(self, spec, shape, name, **kwargs):
        shape = tuple(int(x) for x in shape)
        # TODO(synk): torch.DoubleTensor (float64) has no native TPU path;
        # parameters are kept in float32.
        init = spec(shape).astype(jnp.float32)
        data = init  # JAX arrays are immutable; "Parameter" == the array itself
        param = {"data": data, "init": init, "shape": shape, "name": name, **kwargs}
        self.params[name] = param
        setattr(self, name, data)
        return data

    def get_params(self, **tags):
        ret = []
        for k in self.params:
            add = True
            for t in tags:
                if tags[t] and (t not in self.params[k] or not self.params[k][t]):
                    add = False
                    break
                elif not tags[t] and (t in self.params[k] and self.params[k][t]):
                    add = False
                    break
            if add:
                ret.append(self.params[k]["data"])
        return ret

    def forward(self, inp, **kwargs):
        # Base class forward is abstract in PyTorch.  The pure identity is the
        # only defined data path; per perf review it must not generate HBM
        # traffic, so the input is returned directly.  Derived layers replace
        # this with a pallas_identity_copy-style tiled kernel with real
        # compute in the body.
        return identity_forward(inp, use_pallas=False)


# ---------------------------------------------------------------------------
# Demo / smoke test
# ---------------------------------------------------------------------------
if __name__ == "__main__":
    key = jax.random.PRNGKey(0)
    k_x, k_w, k_r, k_b = jax.random.split(key, 4)

    # Small NCHW input consistent with a conv-style layer stack.
    x = jax.random.normal(k_x, (2, 4, 16, 16), dtype=jnp.float32)

    layer = Layer(incoming=(2, 4, 16, 16))

    # Exercise add_param / get_params with a deterministic init spec.
    def init_spec(shape):
        return jax.random.normal(k_w, shape, dtype=jnp.float32)

    layer.add_param(init_spec, (4, 8), name="W", trainable=True)
    trainable = layer.get_params(trainable=True)
    assert len(trainable) == 1 and trainable[0].shape == (4, 8)

    # 0) Pure-identity fast path (no kernel, no HBM traffic).
    out_fast = jax.block_until_ready(layer.forward(x))
    assert out_fast.shape == x.shape and bool(jnp.array_equal(out_fast, x))

    # 1) Small demo shape through the Pallas template kernel:
    #    2048 elems -> (4, 512) slab, single full-array block.
    out = jax.block_until_ready(pallas_identity_copy(x))
    assert out.shape == x.shape and out.dtype == x.dtype
    assert bool(jnp.array_equal(out, x))

    # 2) Ragged shape (size not a multiple of 128): exercises the fallback
    #    pad + masked-tail-block path.
    x_ragged = jax.random.normal(k_r, (2, 3, 70, 130), dtype=jnp.float32)
    out_ragged = jax.block_until_ready(pallas_identity_copy(x_ragged))
    assert out_ragged.shape == x_ragged.shape
    assert bool(jnp.array_equal(out_ragged, x_ragged))

    # 3) Larger aligned shape: pad-free (1152, 512) slab, 2-tile parallel grid
    #    (both TensorCores busy on v7x), double-buffered DMA pipelining.
    x_big = jax.random.normal(k_b, (4, 4, 192, 192), dtype=jnp.float32)
    out_big = jax.block_until_ready(pallas_identity_copy(x_big))
    assert out_big.shape == x_big.shape
    assert bool(jnp.array_equal(out_big, x_big))

    print("KERNEL_OK")
</pallas_src>

<mosaic_0001>
module attributes {stable_mosaic.version = 11 : i64} {
  func.func @_copy_kernel(%arg0: i32, %arg1: memref<4x512xf32, #tpu.memory_space<vmem>>, %arg2: memref<4x512xf32, #tpu.memory_space<vmem>>) attributes {dimension_semantics = [#tpu.dimension_semantics<parallel>], iteration_bounds = array<i64: 1>, scalar_prefetch = 0 : i64, scratch_operands = 0 : i64, tpu.core_type = #tpu.core_type<tc>, window_params = [{transform_indices = @transform_0, window_bounds = array<i64: 4, 512>}, {transform_indices = @transform_1, window_bounds = array<i64: 4, 512>}]} {
    %c0 = arith.constant 0 : index
    %c0_0 = arith.constant 0 : index
    %0 = vector.load %arg1[%c0, %c0_0] : memref<4x512xf32, #tpu.memory_space<vmem>>, vector<4x512xf32>
    %c0_1 = arith.constant 0 : index
    %c0_2 = arith.constant 0 : index
    %1 = vector.load %arg2[%c0_1, %c0_2] : memref<4x512xf32, #tpu.memory_space<vmem>>, vector<4x512xf32>
    tpu.vector_store %arg2[%c0_1, %c0_2], %0 {strides = array<i32>} : memref<4x512xf32, #tpu.memory_space<vmem>>, vector<4x512xf32>,
    return
  }
  func.func @transform_0(%arg0: i32) -> (i32, i32) {
    %c0_i32 = arith.constant 0 : i32
    %c0_i32_0 = arith.constant 0 : i32
    return %arg0, %c0_i32 : i32, i32
  }
  func.func @transform_1(%arg0: i32) -> (i32, i32) {
    %c0_i32 = arith.constant 0 : i32
    %c0_i32_0 = arith.constant 0 : i32
    return %arg0, %c0_i32 : i32, i32
  }
}

</mosaic_0001>

<llo_original>
// kernel: tpu_custom_call.1
$region0: #{tpu_custom_call.1}
  #allocation0 [shape = 'u32[]', space=smem, size = 0x4, offset = 0x4, fixed_abs, tag = 'smem constant byte address 0x4 - core index']
  #allocation1 [shape = 'u32[144,128]{1,0:T(1,128)}', space=vmem, size = 0x12000, scoped, tag = 'internal scratch']
  %s0 = inlined_call_operand.hbm [shape: f32[4,512], index: 0, kind: input, shape index: {}]
  %s1 = inlined_call_operand.hbm [shape: f32[4,512], index: 1, kind: output, shape index: {}]
  %s2 = sld [smem:[#allocation0]]
  $region18: #{tpu_custom_call.1} parent=0
    _
  %s4 = ssub.s32 1, %s2
  %s5 = scalar_select 0, %s4, %s2
  $region1: #{tpu_custom_call.1} parent=0
    #allocation2 [shape = 'u8[8192]{0}', space=vmem, size = 0x2000, scoped, tag = 'input window, operand 0, single buffered']
    #allocation3 [shape = 's32[1]{0}', space=sflag, size = 0x4, scoped, tag = 'scoped memory for tpu_custom_call.1']
    #allocation4 [shape = 's32[1]{0}', space=sflag, size = 0x4, scoped, tag = 'scoped memory for tpu_custom_call.1']
    #allocation5 [shape = 'u8[8192]{0}', space=vmem, size = 0x2000, scoped, tag = 'output window, operand 0, single buffered']
    %6 = vsyncpa [#allocation3], 0
    %7 = vsyncpa [#allocation4], 0
    // Predicated region
    $region2: #{tpu_custom_call.1} parent=1 // pred_check
      _
    $region3: #{tpu_custom_call.1} parent=1 // pred_check_branch
      %9 = sbr.rel (0) target = $region5
    $region4: #{tpu_custom_call.1} parent=1 // pred_region
      %s11 = ssub.s32 256, 256
      %12 = vsyncadd [#allocation3], %s11
      %s14 = sshll.u32 [#allocation2], 4
      %s15 = int_to_ptr.vmem [resolvable:$true] %s14
      %17 = dma.hbm_to_vmem [thread:$0]  %s0, 256, %s15, [#allocation3]
    $region5: #{tpu_custom_call.1} parent=1 // pred_fallthru
      _
    // Predicated region
    $region6: #{tpu_custom_call.1} parent=1 // pred_check
      _
    $region7: #{tpu_custom_call.1} parent=1 // pred_check_branch
      %19 = sbr.rel (0) target = $region9
    $region8: #{tpu_custom_call.1} parent=1 // pred_region
      %20 = dma.done [#allocation3], 256
    $region9: #{tpu_custom_call.1} parent=1 // pred_fallthru
      _
    %v21 = vld [vmem:[#allocation2] sm:$0xff]
    %v22 = vld [vmem:[#allocation2 + $0x8] sm:$0xff]
    %23 = vst [vmem:[#allocation5] sm:$0xff] %v21
    %24 = vst [vmem:[#allocation5 + $0x8] sm:$0xff] %v22
    // Predicated region
    $region10: #{tpu_custom_call.1} parent=1 // pred_check
      _
    $region11: #{tpu_custom_call.1} parent=1 // pred_check_branch
      %26 = sbr.rel (0) target = $region13
    $region12: #{tpu_custom_call.1} parent=1 // pred_region
      %s28 = ssub.s32 256, 256
      %29 = vsyncadd [#allocation4], %s28
      %s31 = sshll.u32 [#allocation5], 4
      %s32 = int_to_ptr.vmem [resolvable:$true] %s31
      %34 = dma.vmem_to_hbm [thread:$0]  %s32, 256, %s1, [#allocation4]
    $region13: #{tpu_custom_call.1} parent=1 // pred_fallthru
      _
    // Predicated region
    $region14: #{tpu_custom_call.1} parent=1 // pred_check
      _
    $region15: #{tpu_custom_call.1} parent=1 // pred_check_branch
      %36 = sbr.rel (0) target = $region17
    $region16: #{tpu_custom_call.1} parent=1 // pred_region
      %37 = dma.done [#allocation4], 256
    $region17: #{tpu_custom_call.1} parent=1 // pred_fallthru
      _
    %38 = vsyncpa [#allocation3], 1
    %39 = vsyncpa [#allocation4], 1

</llo_original>
